<compile_context>
chip_gen: v6e
topology: v6e:2x2x1
jax: 0.10.0
libtpu: 0.0.40
codegen_flags: <defaults>
</compile_context>

<pallas_src>
import jax
import jax.numpy as jnp
from jax import lax
from jax.experimental import pallas as pl
from jax.experimental.pallas import tpu as pltpu


def _round_up(x, m):
    return ((x + m - 1) // m) * m


def _choose_time_chunk(T, BB, Ep, Hp, budget_bytes=40 * 1024 * 1024):
    """Largest power-of-two time chunk whose block footprint fits the budget."""
    per_t = 2 * BB * (Ep + Hp) * 4                       # emb + out, double-buffered
    fixed = 2 * (Ep * Hp + Hp * Hp + Hp + BB * Hp + BB) * 4
    t_cap = _round_up(T, 8)
    for Tc in (256, 128, 64, 32, 16, 8):
        if Tc <= t_cap and fixed + Tc * per_t <= budget_bytes:
            return Tc
    return 8


def lm_rnn_kernel(lens_ref, emb_ref, wih_ref, whh_ref, b_ref, out_ref, hn_ref):
    """Masked Elman-RNN recurrence over one (batch block, time chunk).

    lens_ref : (BB, 1)    i32  sequence lengths (0 for padded batch rows)
    emb_ref  : (Tc, BB, E) f32 embeddings, time-major, zero-padded
    wih_ref  : (E, H)      f32 W_ih^T (zero-padded)
    whh_ref  : (H, H)      f32 W_hh^T (zero-padded)
    b_ref    : (1, H)      f32 b_ih + b_hh (zero-padded)
    out_ref  : (Tc, BB, H) f32 per-step outputs (zeroed past seq_len)
    hn_ref   : (BB, H)     f32 hidden-state carry / final hidden state
                               (resident across the time-chunk grid axis)
    """
    Tc, BB, Ep = emb_ref.shape
    Hp = hn_ref.shape[-1]
    tc = pl.program_id(1)

    # Initialize the carried hidden state at the first time chunk of each
    # batch block (hn_ref block index is constant across the tc axis).
    @pl.when(tc == 0)
    def _():
        hn_ref[...] = jnp.zeros_like(hn_ref)

    # Hoisted input projection for the whole chunk: one big MXU matmul,
    # written straight into the output block.  Each out_ref[t] is consumed by
    # the recurrence before being overwritten with the masked hidden state.
    # NOTE: for strict f32 agreement at larger E/H, add
    # precision=lax.Precision.HIGHEST to both dots.
    out_ref[...] = jnp.dot(
        emb_ref[...].reshape(Tc * BB, Ep), wih_ref[...],
        preferred_element_type=jnp.float32).reshape(Tc, BB, Hp)

    whh = whh_ref[...]
    bias = b_ref[...]                      # (1, Hp), broadcast per step (filler)
    lens = lens_ref[...]                   # (BB, 1) int32
    t0 = tc * Tc                           # global time offset of this chunk

    # Unroll sized against the 64-vreg file: h / pre / h_cand live per step.
    h_vregs = (BB // 8) * (Hp // 128)
    if h_vregs <= 4:
        unroll = min(Tc, 8)
    elif h_vregs <= 16:
        unroll = 4
    else:
        unroll = 2

    def step(t, h):
        pre = out_ref[t] + bias + jnp.dot(h, whh,
                                          preferred_element_type=jnp.float32)
        h_cand = jnp.tanh(pre)                       # (BB, Hp)
        valid = (t0 + t) < lens                      # (BB, 1) bool
        out_ref[t] = jnp.where(valid, h_cand, 0.0)   # pad positions -> 0
        return jnp.where(valid, h_cand, h)           # freeze rows past length

    hn_ref[...] = lax.fori_loop(0, Tc, step, hn_ref[...], unroll=unroll)


def lm_forward(seq_idx, seq_len, params):
    """JAX wrapper mirroring LM.forward -> (output[B,T,H], hn[1,B,H])."""
    B, T = seq_idx.shape
    emb_table = params["embedding"]                  # (V, E)
    V, E = emb_table.shape
    H = params["w_hh"].shape[0]

    # padded, TPU-friendly shapes
    Ep = _round_up(E, 128)                           # lane-aligned
    Hp = _round_up(H, 128)
    Bp8 = _round_up(B, 8)                            # sublane-aligned batch
    BB = min(Bp8, 128)                               # batch block (MXU rows)
    Bp = _round_up(B, BB)
    Tc = _choose_time_chunk(T, BB, Ep, Hp)           # time chunk
    Tp = _round_up(T, Tc)

    # embedding lookup via XLA gather, directly time-major, then zero-pad
    emb = emb_table[jnp.transpose(seq_idx).astype(jnp.int32)]       # (T, B, E)
    emb = jnp.pad(emb, ((0, Tp - T), (0, Bp - B), (0, Ep - E)))
    emb = emb.astype(jnp.float32)                                   # (Tp,Bp,Ep)

    # per-row lengths (padded rows get length 0 -> always invalid)
    lens = jnp.pad(seq_len.astype(jnp.int32), (0, Bp - B)).reshape(Bp, 1)

    wih_t = jnp.pad(jnp.transpose(params["w_ih"]),
                    ((0, Ep - E), (0, Hp - H))).astype(jnp.float32)  # (Ep, Hp)
    whh_t = jnp.pad(jnp.transpose(params["w_hh"]),
                    ((0, Hp - H), (0, Hp - H))).astype(jnp.float32)  # (Hp, Hp)
    bias = jnp.pad(params["b_ih"] + params["b_hh"],
                   (0, Hp - H)).reshape(1, Hp).astype(jnp.float32)   # (1, Hp)

    # size VMEM limit from the real block footprint (cap below v7x's 64 MiB)
    per_t = 2 * BB * (Ep + Hp) * 4
    fixed = 2 * (Ep * Hp + Hp * Hp + Hp + BB * Hp + BB) * 4
    vmem_limit = int(min(max(32 << 20, fixed + Tc * per_t + (8 << 20)),
                         56 << 20))

    grid = (Bp // BB, Tp // Tc)

    out_tbh, hn = pl.pallas_call(
        lm_rnn_kernel,
        out_shape=(jax.ShapeDtypeStruct((Tp, Bp, Hp), jnp.float32),
                   jax.ShapeDtypeStruct((Bp, Hp), jnp.float32)),
        grid_spec=pltpu.PrefetchScalarGridSpec(
            num_scalar_prefetch=0,
            grid=grid,
            in_specs=[
                pl.BlockSpec((BB, 1), lambda b, tc: (b, 0)),
                pl.BlockSpec((Tc, BB, Ep), lambda b, tc: (tc, b, 0)),
                pl.BlockSpec((Ep, Hp), lambda b, tc: (0, 0)),
                pl.BlockSpec((Hp, Hp), lambda b, tc: (0, 0)),
                pl.BlockSpec((1, Hp), lambda b, tc: (0, 0)),
            ],
            out_specs=(
                pl.BlockSpec((Tc, BB, Hp), lambda b, tc: (tc, b, 0)),
                pl.BlockSpec((BB, Hp), lambda b, tc: (b, 0)),
            ),
        ),
        compiler_params=pltpu.CompilerParams(
            dimension_semantics=("parallel", "arbitrary"),
            vmem_limit_bytes=vmem_limit,
        ),
    )(lens, emb, wih_t, whh_t, bias)

    # strip padding, return batch-first like PyTorch (pad_packed_sequence)
    # TODO(synk): fuse this transpose into the consumer (or emit batch-first
    # from the kernel) to save an HBM round-trip of the largest tensor.
    output = jnp.transpose(out_tbh[:T, :B, :H], (1, 0, 2))   # (B, T, H)
    hn = hn[:B, :H][None]                                    # (num_layers=1, B, H)
    return output, hn


def lm_reference(seq_idx, seq_len, params):
    """Pure-JAX reference reproducing the packed-RNN semantics."""
    emb = params["embedding"][seq_idx]                            # (B, T, E)
    B, T, E = emb.shape
    H = params["w_hh"].shape[0]
    wih, whh = params["w_ih"], params["w_hh"]
    b = params["b_ih"] + params["b_hh"]
    h = jnp.zeros((B, H), jnp.float32)
    outs = []
    for t in range(T):
        h_cand = jnp.tanh(emb[:, t] @ wih.T + h @ whh.T + b)
        valid = (seq_len > t).astype(jnp.float32)[:, None]
        outs.append(valid * h_cand)
        h = valid * h_cand + (1.0 - valid) * h
    return jnp.stack(outs, axis=1), h[None]


def init_params(key, vocab_size, embedding_dim, hidden_size):
    k0, k1, k2, k3, k4 = jax.random.split(key, 5)
    bound = 1.0 / jnp.sqrt(hidden_size)
    return {
        "embedding": jax.random.normal(k0, (vocab_size, embedding_dim),
                                       jnp.float32),
        "w_ih": jax.random.uniform(k1, (hidden_size, embedding_dim),
                                   jnp.float32, -bound, bound),
        "w_hh": jax.random.uniform(k2, (hidden_size, hidden_size),
                                   jnp.float32, -bound, bound),
        "b_ih": jax.random.uniform(k3, (hidden_size,), jnp.float32,
                                   -bound, bound),
        "b_hh": jax.random.uniform(k4, (hidden_size,), jnp.float32,
                                   -bound, bound),
    }


if __name__ == "__main__":
    VOCAB, EMB, HID = 16, 16, 32
    B, T = 4, 8

    key = jax.random.PRNGKey(0)
    kp, ki = jax.random.split(key)
    params = init_params(kp, VOCAB, EMB, HID)

    # lengths sorted descending (pack_padded_sequence enforce_sorted=True)
    seq_len = jnp.array([8, 6, 4, 2], dtype=jnp.int32)
    seq_idx = jax.random.randint(ki, (B, T), 1, VOCAB, dtype=jnp.int32)
    # zero (pad) tokens past each sequence's length, like the doctest inputs
    t_iota = jnp.arange(T, dtype=jnp.int32)[None, :]
    seq_idx = jnp.where(t_iota < seq_len[:, None], seq_idx, 0)

    output, hn = jax.block_until_ready(lm_forward(seq_idx, seq_len, params))
    ref_out, ref_hn = lm_reference(seq_idx, seq_len, params)

    assert output.shape == (B, T, HID)
    assert hn.shape == (1, B, HID)
    assert jnp.allclose(output, ref_out, atol=1e-4, rtol=1e-4)
    assert jnp.allclose(hn, ref_hn, atol=1e-4, rtol=1e-4)

    print("KERNEL_OK")
</pallas_src>

<mosaic_0001>
module attributes {stable_mosaic.version = 11 : i64} {
  func.func @lm_rnn_kernel(%arg0: i32, %arg1: i32, %arg2: memref<8x1xi32, #tpu.memory_space<vmem>>, %arg3: memref<8x8x128xf32, #tpu.memory_space<vmem>>, %arg4: memref<128x128xf32, #tpu.memory_space<vmem>>, %arg5: memref<128x128xf32, #tpu.memory_space<vmem>>, %arg6: memref<1x128xf32, #tpu.memory_space<vmem>>, %arg7: memref<8x8x128xf32, #tpu.memory_space<vmem>>, %arg8: memref<8x128xf32, #tpu.memory_space<vmem>>) attributes {dimension_semantics = [#tpu.dimension_semantics<parallel>, #tpu.dimension_semantics<arbitrary>], iteration_bounds = array<i64: 1, 1>, scalar_prefetch = 0 : i64, scratch_operands = 0 : i64, tpu.core_type = #tpu.core_type<tc>, window_params = [{transform_indices = @transform_0, window_bounds = array<i64: 8, 1>}, {transform_indices = @transform_1, window_bounds = array<i64: 8, 8, 128>}, {pipeline_mode = #tpu.pipeline_mode<synchronous>, transform_indices = @transform_2, window_bounds = array<i64: 128, 128>}, {pipeline_mode = #tpu.pipeline_mode<synchronous>, transform_indices = @transform_3, window_bounds = array<i64: 128, 128>}, {pipeline_mode = #tpu.pipeline_mode<synchronous>, transform_indices = @transform_4, window_bounds = array<i64: 1, 128>}, {transform_indices = @transform_5, window_bounds = array<i64: 8, 8, 128>}, {transform_indices = @transform_6, window_bounds = array<i64: 8, 128>}]} {
    %c0_i32 = arith.constant 0 : i32
    %0 = arith.cmpi eq, %arg1, %c0_i32 : i32
    %1 = arith.extui %0 : i1 to i32
    %c0_i32_0 = arith.constant 0 : i32
    %2 = arith.cmpi ne, %1, %c0_i32_0 : i32
    scf.if %2 {
      %cst_68 = arith.constant 0.000000e+00 : f32
      %191 = vector.broadcast %cst_68 : f32 to vector<8x128xf32>
      %c0_69 = arith.constant 0 : index
      %c0_70 = arith.constant 0 : index
      %192 = vector.load %arg8[%c0_69, %c0_70] : memref<8x128xf32, #tpu.memory_space<vmem>>, vector<8x128xf32>
      tpu.vector_store %arg8[%c0_69, %c0_70], %191 {strides = array<i32>} : memref<8x128xf32, #tpu.memory_space<vmem>>, vector<8x128xf32>,
    } else {
    }
    %c0 = arith.constant 0 : index
    %c0_1 = arith.constant 0 : index
    %c0_2 = arith.constant 0 : index
    %3 = vector.load %arg3[%c0, %c0_1, %c0_2] : memref<8x8x128xf32, #tpu.memory_space<vmem>>, vector<8x8x128xf32>
    %4 = vector.shape_cast %3 : vector<8x8x128xf32> to vector<64x128xf32>
    %c0_3 = arith.constant 0 : index
    %c0_4 = arith.constant 0 : index
    %5 = vector.load %arg4[%c0_3, %c0_4] : memref<128x128xf32, #tpu.memory_space<vmem>>, vector<128x128xf32>
    %cst = arith.constant dense<0.000000e+00> : vector<64x128xf32>
    %6 = tpu.matmul %4, %5, %cst {dimension_numbers = #tpu.dot_dimension_numbers<[1], [0], [0], [1], [0, 0, 1, 1], [], []>} : vector<64x128xf32>, vector<128x128xf32>, vector<64x128xf32> -> vector<64x128xf32>
    %7 = vector.shape_cast %6 : vector<64x128xf32> to vector<8x8x128xf32>
    %c0_5 = arith.constant 0 : index
    %c0_6 = arith.constant 0 : index
    %c0_7 = arith.constant 0 : index
    %8 = vector.load %arg7[%c0_5, %c0_6, %c0_7] : memref<8x8x128xf32, #tpu.memory_space<vmem>>, vector<8x8x128xf32>
    tpu.vector_store %arg7[%c0_5, %c0_6, %c0_7], %7 {strides = array<i32>} : memref<8x8x128xf32, #tpu.memory_space<vmem>>, vector<8x8x128xf32>,
    %c0_8 = arith.constant 0 : index
    %c0_9 = arith.constant 0 : index
    %9 = vector.load %arg5[%c0_8, %c0_9] : memref<128x128xf32, #tpu.memory_space<vmem>>, vector<128x128xf32>
    %c0_10 = arith.constant 0 : index
    %c0_11 = arith.constant 0 : index
    %10 = vector.load %arg6[%c0_10, %c0_11] : memref<1x128xf32, #tpu.memory_space<vmem>>, vector<1x128xf32>
    %c0_12 = arith.constant 0 : index
    %c0_13 = arith.constant 0 : index
    %11 = vector.load %arg2[%c0_12, %c0_13] : memref<8x1xi32, #tpu.memory_space<vmem>>, vector<8x1xi32>
    %c8_i32 = arith.constant 8 : i32
    %12 = arith.muli %arg1, %c8_i32 : i32
    %c0_14 = arith.constant 0 : index
    %c0_15 = arith.constant 0 : index
    %13 = vector.load %arg8[%c0_14, %c0_15] : memref<8x128xf32, #tpu.memory_space<vmem>>, vector<8x128xf32>
    %c0_i32_16 = arith.constant 0 : i32
    %14 = arith.index_cast %c0_i32_16 : i32 to index
    %c0_17 = arith.constant 0 : index
    %c0_18 = arith.constant 0 : index
    %15 = vector.load %arg7[%14, %c0_17, %c0_18] : memref<8x8x128xf32, #tpu.memory_space<vmem>>, vector<1x8x128xf32>
    %16 = vector.shape_cast %15 : vector<1x8x128xf32> to vector<8x128xf32>
    %17 = vector.broadcast %10 : vector<1x128xf32> to vector<8x128xf32>
    %18 = arith.addf %16, %17 : vector<8x128xf32>
    %cst_19 = arith.constant dense<0.000000e+00> : vector<8x128xf32>
    %19 = tpu.matmul %13, %9, %cst_19 {dimension_numbers = #tpu.dot_dimension_numbers<[1], [0], [0], [1], [0, 0, 1, 1], [], []>} : vector<8x128xf32>, vector<128x128xf32>, vector<8x128xf32> -> vector<8x128xf32>
    %20 = arith.addf %18, %19 : vector<8x128xf32>
    %21 = math.tanh %20 : vector<8x128xf32>
    %22 = arith.addi %12, %c0_i32_16 : i32
    %23 = vector.broadcast %22 : i32 to vector<8x1xi32>
    %24 = arith.cmpi slt, %23, %11 : vector<8x1xi32>
    %cst_20 = arith.constant 0.000000e+00 : f32
    %25 = vector.shape_cast %24 : vector<8x1xi1> to vector<8x1xi1>
    %26 = vector.broadcast %25 : vector<8x1xi1> to vector<8x128xi1>
    %27 = vector.broadcast %cst_20 : f32 to vector<8x128xf32>
    %28 = arith.select %26, %21, %27 : vector<8x128xi1>, vector<8x128xf32>
    %29 = arith.index_cast %c0_i32_16 : i32 to index
    %c0_21 = arith.constant 0 : index
    %c0_22 = arith.constant 0 : index
    %30 = vector.load %arg7[%29, %c0_21, %c0_22] : memref<8x8x128xf32, #tpu.memory_space<vmem>>, vector<1x8x128xf32>
    %31 = vector.shape_cast %30 : vector<1x8x128xf32> to vector<8x128xf32>
    %32 = vector.shape_cast %28 : vector<8x128xf32> to vector<1x8x128xf32>
    tpu.vector_store %arg7[%29, %c0_21, %c0_22], %32 {strides = array<i32>} : memref<8x8x128xf32, #tpu.memory_space<vmem>>, vector<1x8x128xf32>,
    %33 = vector.shape_cast %24 : vector<8x1xi1> to vector<8x1xi1>
    %34 = vector.broadcast %33 : vector<8x1xi1> to vector<8x128xi1>
    %35 = arith.select %34, %21, %13 : vector<8x128xi1>, vector<8x128xf32>
    %c1_i32 = arith.constant 1 : i32
    %36 = arith.index_cast %c1_i32 : i32 to index
    %c0_23 = arith.constant 0 : index
    %c0_24 = arith.constant 0 : index
    %37 = vector.load %arg7[%36, %c0_23, %c0_24] : memref<8x8x128xf32, #tpu.memory_space<vmem>>, vector<1x8x128xf32>
    %38 = vector.shape_cast %37 : vector<1x8x128xf32> to vector<8x128xf32>
    %39 = vector.broadcast %10 : vector<1x128xf32> to vector<8x128xf32>
    %40 = arith.addf %38, %39 : vector<8x128xf32>
    %cst_25 = arith.constant dense<0.000000e+00> : vector<8x128xf32>
    %41 = tpu.matmul %35, %9, %cst_25 {dimension_numbers = #tpu.dot_dimension_numbers<[1], [0], [0], [1], [0, 0, 1, 1], [], []>} : vector<8x128xf32>, vector<128x128xf32>, vector<8x128xf32> -> vector<8x128xf32>
    %42 = arith.addf %40, %41 : vector<8x128xf32>
    %43 = math.tanh %42 : vector<8x128xf32>
    %44 = arith.addi %12, %c1_i32 : i32
    %45 = vector.broadcast %44 : i32 to vector<8x1xi32>
    %46 = arith.cmpi slt, %45, %11 : vector<8x1xi32>
    %cst_26 = arith.constant 0.000000e+00 : f32
    %47 = vector.shape_cast %46 : vector<8x1xi1> to vector<8x1xi1>
    %48 = vector.broadcast %47 : vector<8x1xi1> to vector<8x128xi1>
    %49 = vector.broadcast %cst_26 : f32 to vector<8x128xf32>
    %50 = arith.select %48, %43, %49 : vector<8x128xi1>, vector<8x128xf32>
    %51 = arith.index_cast %c1_i32 : i32 to index
    %c0_27 = arith.constant 0 : index
    %c0_28 = arith.constant 0 : index
    %52 = vector.load %arg7[%51, %c0_27, %c0_28] : memref<8x8x128xf32, #tpu.memory_space<vmem>>, vector<1x8x128xf32>
    %53 = vector.shape_cast %52 : vector<1x8x128xf32> to vector<8x128xf32>
    %54 = vector.shape_cast %50 : vector<8x128xf32> to vector<1x8x128xf32>
    tpu.vector_store %arg7[%51, %c0_27, %c0_28], %54 {strides = array<i32>} : memref<8x8x128xf32, #tpu.memory_space<vmem>>, vector<1x8x128xf32>,
    %55 = vector.shape_cast %46 : vector<8x1xi1> to vector<8x1xi1>
    %56 = vector.broadcast %55 : vector<8x1xi1> to vector<8x128xi1>
    %57 = arith.select %56, %43, %35 : vector<8x128xi1>, vector<8x128xf32>
    %c2_i32 = arith.constant 2 : i32
    %58 = arith.index_cast %c2_i32 : i32 to index
    %c0_29 = arith.constant 0 : index
    %c0_30 = arith.constant 0 : index
    %59 = vector.load %arg7[%58, %c0_29, %c0_30] : memref<8x8x128xf32, #tpu.memory_space<vmem>>, vector<1x8x128xf32>
    %60 = vector.shape_cast %59 : vector<1x8x128xf32> to vector<8x128xf32>
    %61 = vector.broadcast %10 : vector<1x128xf32> to vector<8x128xf32>
    %62 = arith.addf %60, %61 : vector<8x128xf32>
    %cst_31 = arith.constant dense<0.000000e+00> : vector<8x128xf32>
    %63 = tpu.matmul %57, %9, %cst_31 {dimension_numbers = #tpu.dot_dimension_numbers<[1], [0], [0], [1], [0, 0, 1, 1], [], []>} : vector<8x128xf32>, vector<128x128xf32>, vector<8x128xf32> -> vector<8x128xf32>
    %64 = arith.addf %62, %63 : vector<8x128xf32>
    %65 = math.tanh %64 : vector<8x128xf32>
    %66 = arith.addi %12, %c2_i32 : i32
    %67 = vector.broadcast %66 : i32 to vector<8x1xi32>
    %68 = arith.cmpi slt, %67, %11 : vector<8x1xi32>
    %cst_32 = arith.constant 0.000000e+00 : f32
    %69 = vector.shape_cast %68 : vector<8x1xi1> to vector<8x1xi1>
    %70 = vector.broadcast %69 : vector<8x1xi1> to vector<8x128xi1>
    %71 = vector.broadcast %cst_32 : f32 to vector<8x128xf32>
    %72 = arith.select %70, %65, %71 : vector<8x128xi1>, vector<8x128xf32>
    %73 = arith.index_cast %c2_i32 : i32 to index
    %c0_33 = arith.constant 0 : index
    %c0_34 = arith.constant 0 : index
    %74 = vector.load %arg7[%73, %c0_33, %c0_34] : memref<8x8x128xf32, #tpu.memory_space<vmem>>, vector<1x8x128xf32>
    %75 = vector.shape_cast %74 : vector<1x8x128xf32> to vector<8x128xf32>
    %76 = vector.shape_cast %72 : vector<8x128xf32> to vector<1x8x128xf32>
    tpu.vector_store %arg7[%73, %c0_33, %c0_34], %76 {strides = array<i32>} : memref<8x8x128xf32, #tpu.memory_space<vmem>>, vector<1x8x128xf32>,
    %77 = vector.shape_cast %68 : vector<8x1xi1> to vector<8x1xi1>
    %78 = vector.broadcast %77 : vector<8x1xi1> to vector<8x128xi1>
    %79 = arith.select %78, %65, %57 : vector<8x128xi1>, vector<8x128xf32>
    %c3_i32 = arith.constant 3 : i32
    %80 = arith.index_cast %c3_i32 : i32 to index
    %c0_35 = arith.constant 0 : index
    %c0_36 = arith.constant 0 : index
    %81 = vector.load %arg7[%80, %c0_35, %c0_36] : memref<8x8x128xf32, #tpu.memory_space<vmem>>, vector<1x8x128xf32>
    %82 = vector.shape_cast %81 : vector<1x8x128xf32> to vector<8x128xf32>
    %83 = vector.broadcast %10 : vector<1x128xf32> to vector<8x128xf32>
    %84 = arith.addf %82, %83 : vector<8x128xf32>
    %cst_37 = arith.constant dense<0.000000e+00> : vector<8x128xf32>
    %85 = tpu.matmul %79, %9, %cst_37 {dimension_numbers = #tpu.dot_dimension_numbers<[1], [0], [0], [1], [0, 0, 1, 1], [], []>} : vector<8x128xf32>, vector<128x128xf32>, vector<8x128xf32> -> vector<8x128xf32>
    %86 = arith.addf %84, %85 : vector<8x128xf32>
    %87 = math.tanh %86 : vector<8x128xf32>
    %88 = arith.addi %12, %c3_i32 : i32
    %89 = vector.broadcast %88 : i32 to vector<8x1xi32>
    %90 = arith.cmpi slt, %89, %11 : vector<8x1xi32>
    %cst_38 = arith.constant 0.000000e+00 : f32
    %91 = vector.shape_cast %90 : vector<8x1xi1> to vector<8x1xi1>
    %92 = vector.broadcast %91 : vector<8x1xi1> to vector<8x128xi1>
    %93 = vector.broadcast %cst_38 : f32 to vector<8x128xf32>
    %94 = arith.select %92, %87, %93 : vector<8x128xi1>, vector<8x128xf32>
    %95 = arith.index_cast %c3_i32 : i32 to index
    %c0_39 = arith.constant 0 : index
    %c0_40 = arith.constant 0 : index
    %96 = vector.load %arg7[%95, %c0_39, %c0_40] : memref<8x8x128xf32, #tpu.memory_space<vmem>>, vector<1x8x128xf32>
    %97 = vector.shape_cast %96 : vector<1x8x128xf32> to vector<8x128xf32>
    %98 = vector.shape_cast %94 : vector<8x128xf32> to vector<1x8x128xf32>
    tpu.vector_store %arg7[%95, %c0_39, %c0_40], %98 {strides = array<i32>} : memref<8x8x128xf32, #tpu.memory_space<vmem>>, vector<1x8x128xf32>,
    %99 = vector.shape_cast %90 : vector<8x1xi1> to vector<8x1xi1>
    %100 = vector.broadcast %99 : vector<8x1xi1> to vector<8x128xi1>
    %101 = arith.select %100, %87, %79 : vector<8x128xi1>, vector<8x128xf32>
    %c4_i32 = arith.constant 4 : i32
    %102 = arith.index_cast %c4_i32 : i32 to index
    %c0_41 = arith.constant 0 : index
    %c0_42 = arith.constant 0 : index
    %103 = vector.load %arg7[%102, %c0_41, %c0_42] : memref<8x8x128xf32, #tpu.memory_space<vmem>>, vector<1x8x128xf32>
    %104 = vector.shape_cast %103 : vector<1x8x128xf32> to vector<8x128xf32>
    %105 = vector.broadcast %10 : vector<1x128xf32> to vector<8x128xf32>
    %106 = arith.addf %104, %105 : vector<8x128xf32>
    %cst_43 = arith.constant dense<0.000000e+00> : vector<8x128xf32>
    %107 = tpu.matmul %101, %9, %cst_43 {dimension_numbers = #tpu.dot_dimension_numbers<[1], [0], [0], [1], [0, 0, 1, 1], [], []>} : vector<8x128xf32>, vector<128x128xf32>, vector<8x128xf32> -> vector<8x128xf32>
    %108 = arith.addf %106, %107 : vector<8x128xf32>
    %109 = math.tanh %108 : vector<8x128xf32>
    %110 = arith.addi %12, %c4_i32 : i32
    %111 = vector.broadcast %110 : i32 to vector<8x1xi32>
    %112 = arith.cmpi slt, %111, %11 : vector<8x1xi32>
    %cst_44 = arith.constant 0.000000e+00 : f32
    %113 = vector.shape_cast %112 : vector<8x1xi1> to vector<8x1xi1>
    %114 = vector.broadcast %113 : vector<8x1xi1> to vector<8x128xi1>
    %115 = vector.broadcast %cst_44 : f32 to vector<8x128xf32>
    %116 = arith.select %114, %109, %115 : vector<8x128xi1>, vector<8x128xf32>
    %117 = arith.index_cast %c4_i32 : i32 to index
    %c0_45 = arith.constant 0 : index
    %c0_46 = arith.constant 0 : index
    %118 = vector.load %arg7[%117, %c0_45, %c0_46] : memref<8x8x128xf32, #tpu.memory_space<vmem>>, vector<1x8x128xf32>
    %119 = vector.shape_cast %118 : vector<1x8x128xf32> to vector<8x128xf32>
    %120 = vector.shape_cast %116 : vector<8x128xf32> to vector<1x8x128xf32>
    tpu.vector_store %arg7[%117, %c0_45, %c0_46], %120 {strides = array<i32>} : memref<8x8x128xf32, #tpu.memory_space<vmem>>, vector<1x8x128xf32>,
    %121 = vector.shape_cast %112 : vector<8x1xi1> to vector<8x1xi1>
    %122 = vector.broadcast %121 : vector<8x1xi1> to vector<8x128xi1>
    %123 = arith.select %122, %109, %101 : vector<8x128xi1>, vector<8x128xf32>
    %c5_i32 = arith.constant 5 : i32
    %124 = arith.index_cast %c5_i32 : i32 to index
    %c0_47 = arith.constant 0 : index
    %c0_48 = arith.constant 0 : index
    %125 = vector.load %arg7[%124, %c0_47, %c0_48] : memref<8x8x128xf32, #tpu.memory_space<vmem>>, vector<1x8x128xf32>
    %126 = vector.shape_cast %125 : vector<1x8x128xf32> to vector<8x128xf32>
    %127 = vector.broadcast %10 : vector<1x128xf32> to vector<8x128xf32>
    %128 = arith.addf %126, %127 : vector<8x128xf32>
    %cst_49 = arith.constant dense<0.000000e+00> : vector<8x128xf32>
    %129 = tpu.matmul %123, %9, %cst_49 {dimension_numbers = #tpu.dot_dimension_numbers<[1], [0], [0], [1], [0, 0, 1, 1], [], []>} : vector<8x128xf32>, vector<128x128xf32>, vector<8x128xf32> -> vector<8x128xf32>
    %130 = arith.addf %128, %129 : vector<8x128xf32>
    %131 = math.tanh %130 : vector<8x128xf32>
    %132 = arith.addi %12, %c5_i32 : i32
    %133 = vector.broadcast %132 : i32 to vector<8x1xi32>
    %134 = arith.cmpi slt, %133, %11 : vector<8x1xi32>
    %cst_50 = arith.constant 0.000000e+00 : f32
    %135 = vector.shape_cast %134 : vector<8x1xi1> to vector<8x1xi1>
    %136 = vector.broadcast %135 : vector<8x1xi1> to vector<8x128xi1>
    %137 = vector.broadcast %cst_50 : f32 to vector<8x128xf32>
    %138 = arith.select %136, %131, %137 : vector<8x128xi1>, vector<8x128xf32>
    %139 = arith.index_cast %c5_i32 : i32 to index
    %c0_51 = arith.constant 0 : index
    %c0_52 = arith.constant 0 : index
    %140 = vector.load %arg7[%139, %c0_51, %c0_52] : memref<8x8x128xf32, #tpu.memory_space<vmem>>, vector<1x8x128xf32>
    %141 = vector.shape_cast %140 : vector<1x8x128xf32> to vector<8x128xf32>
    %142 = vector.shape_cast %138 : vector<8x128xf32> to vector<1x8x128xf32>
    tpu.vector_store %arg7[%139, %c0_51, %c0_52], %142 {strides = array<i32>} : memref<8x8x128xf32, #tpu.memory_space<vmem>>, vector<1x8x128xf32>,
    %143 = vector.shape_cast %134 : vector<8x1xi1> to vector<8x1xi1>
    %144 = vector.broadcast %143 : vector<8x1xi1> to vector<8x128xi1>
    %145 = arith.select %144, %131, %123 : vector<8x128xi1>, vector<8x128xf32>
    %c6_i32 = arith.constant 6 : i32
    %146 = arith.index_cast %c6_i32 : i32 to index
    %c0_53 = arith.constant 0 : index
    %c0_54 = arith.constant 0 : index
    %147 = vector.load %arg7[%146, %c0_53, %c0_54] : memref<8x8x128xf32, #tpu.memory_space<vmem>>, vector<1x8x128xf32>
    %148 = vector.shape_cast %147 : vector<1x8x128xf32> to vector<8x128xf32>
    %149 = vector.broadcast %10 : vector<1x128xf32> to vector<8x128xf32>
    %150 = arith.addf %148, %149 : vector<8x128xf32>
    %cst_55 = arith.constant dense<0.000000e+00> : vector<8x128xf32>
    %151 = tpu.matmul %145, %9, %cst_55 {dimension_numbers = #tpu.dot_dimension_numbers<[1], [0], [0], [1], [0, 0, 1, 1], [], []>} : vector<8x128xf32>, vector<128x128xf32>, vector<8x128xf32> -> vector<8x128xf32>
    %152 = arith.addf %150, %151 : vector<8x128xf32>
    %153 = math.tanh %152 : vector<8x128xf32>
    %154 = arith.addi %12, %c6_i32 : i32
    %155 = vector.broadcast %154 : i32 to vector<8x1xi32>
    %156 = arith.cmpi slt, %155, %11 : vector<8x1xi32>
    %cst_56 = arith.constant 0.000000e+00 : f32
    %157 = vector.shape_cast %156 : vector<8x1xi1> to vector<8x1xi1>
    %158 = vector.broadcast %157 : vector<8x1xi1> to vector<8x128xi1>
    %159 = vector.broadcast %cst_56 : f32 to vector<8x128xf32>
    %160 = arith.select %158, %153, %159 : vector<8x128xi1>, vector<8x128xf32>
    %161 = arith.index_cast %c6_i32 : i32 to index
    %c0_57 = arith.constant 0 : index
    %c0_58 = arith.constant 0 : index
    %162 = vector.load %arg7[%161, %c0_57, %c0_58] : memref<8x8x128xf32, #tpu.memory_space<vmem>>, vector<1x8x128xf32>
    %163 = vector.shape_cast %162 : vector<1x8x128xf32> to vector<8x128xf32>
    %164 = vector.shape_cast %160 : vector<8x128xf32> to vector<1x8x128xf32>
    tpu.vector_store %arg7[%161, %c0_57, %c0_58], %164 {strides = array<i32>} : memref<8x8x128xf32, #tpu.memory_space<vmem>>, vector<1x8x128xf32>,
    %165 = vector.shape_cast %156 : vector<8x1xi1> to vector<8x1xi1>
    %166 = vector.broadcast %165 : vector<8x1xi1> to vector<8x128xi1>
    %167 = arith.select %166, %153, %145 : vector<8x128xi1>, vector<8x128xf32>
    %c7_i32 = arith.constant 7 : i32
    %168 = arith.index_cast %c7_i32 : i32 to index
    %c0_59 = arith.constant 0 : index
    %c0_60 = arith.constant 0 : index
    %169 = vector.load %arg7[%168, %c0_59, %c0_60] : memref<8x8x128xf32, #tpu.memory_space<vmem>>, vector<1x8x128xf32>
    %170 = vector.shape_cast %169 : vector<1x8x128xf32> to vector<8x128xf32>
    %171 = vector.broadcast %10 : vector<1x128xf32> to vector<8x128xf32>
    %172 = arith.addf %170, %171 : vector<8x128xf32>
    %cst_61 = arith.constant dense<0.000000e+00> : vector<8x128xf32>
    %173 = tpu.matmul %167, %9, %cst_61 {dimension_numbers = #tpu.dot_dimension_numbers<[1], [0], [0], [1], [0, 0, 1, 1], [], []>} : vector<8x128xf32>, vector<128x128xf32>, vector<8x128xf32> -> vector<8x128xf32>
    %174 = arith.addf %172, %173 : vector<8x128xf32>
    %175 = math.tanh %174 : vector<8x128xf32>
    %176 = arith.addi %12, %c7_i32 : i32
    %177 = vector.broadcast %176 : i32 to vector<8x1xi32>
    %178 = arith.cmpi slt, %177, %11 : vector<8x1xi32>
    %cst_62 = arith.constant 0.000000e+00 : f32
    %179 = vector.shape_cast %178 : vector<8x1xi1> to vector<8x1xi1>
    %180 = vector.broadcast %179 : vector<8x1xi1> to vector<8x128xi1>
    %181 = vector.broadcast %cst_62 : f32 to vector<8x128xf32>
    %182 = arith.select %180, %175, %181 : vector<8x128xi1>, vector<8x128xf32>
    %183 = arith.index_cast %c7_i32 : i32 to index
    %c0_63 = arith.constant 0 : index
    %c0_64 = arith.constant 0 : index
    %184 = vector.load %arg7[%183, %c0_63, %c0_64] : memref<8x8x128xf32, #tpu.memory_space<vmem>>, vector<1x8x128xf32>
    %185 = vector.shape_cast %184 : vector<1x8x128xf32> to vector<8x128xf32>
    %186 = vector.shape_cast %182 : vector<8x128xf32> to vector<1x8x128xf32>
    tpu.vector_store %arg7[%183, %c0_63, %c0_64], %186 {strides = array<i32>} : memref<8x8x128xf32, #tpu.memory_space<vmem>>, vector<1x8x128xf32>,
    %187 = vector.shape_cast %178 : vector<8x1xi1> to vector<8x1xi1>
    %188 = vector.broadcast %187 : vector<8x1xi1> to vector<8x128xi1>
    %189 = arith.select %188, %175, %167 : vector<8x128xi1>, vector<8x128xf32>
    %c8_i32_65 = arith.constant 8 : i32
    %c0_66 = arith.constant 0 : index
    %c0_67 = arith.constant 0 : index
    %190 = vector.load %arg8[%c0_66, %c0_67] : memref<8x128xf32, #tpu.memory_space<vmem>>, vector<8x128xf32>
    tpu.vector_store %arg8[%c0_66, %c0_67], %189 {strides = array<i32>} : memref<8x128xf32, #tpu.memory_space<vmem>>, vector<8x128xf32>,
    return
  }
  func.func @transform_0(%arg0: i32, %arg1: i32) -> (i32, i32) {
    %c0_i32 = arith.constant 0 : i32
    %c0_i32_0 = arith.constant 0 : i32
    return %arg0, %c0_i32 : i32, i32
  }
  func.func @transform_1(%arg0: i32, %arg1: i32) -> (i32, i32, i32) {
    %c0_i32 = arith.constant 0 : i32
    %c0_i32_0 = arith.constant 0 : i32
    return %arg1, %arg0, %c0_i32 : i32, i32, i32
  }
  func.func @transform_2(%arg0: i32, %arg1: i32) -> (i32, i32) {
    %c0_i32 = arith.constant 0 : i32
    %c0_i32_0 = arith.constant 0 : i32
    %c0_i32_1 = arith.constant 0 : i32
    return %c0_i32, %c0_i32_0 : i32, i32
  }
  func.func @transform_3(%arg0: i32, %arg1: i32) -> (i32, i32) {
    %c0_i32 = arith.constant 0 : i32
    %c0_i32_0 = arith.constant 0 : i32
    %c0_i32_1 = arith.constant 0 : i32
    return %c0_i32, %c0_i32_0 : i32, i32
  }
  func.func @transform_4(%arg0: i32, %arg1: i32) -> (i32, i32) {
    %c0_i32 = arith.constant 0 : i32
    %c0_i32_0 = arith.constant 0 : i32
    %c0_i32_1 = arith.constant 0 : i32
    return %c0_i32, %c0_i32_0 : i32, i32
  }
  func.func @transform_5(%arg0: i32, %arg1: i32) -> (i32, i32, i32) {
    %c0_i32 = arith.constant 0 : i32
    %c0_i32_0 = arith.constant 0 : i32
    return %arg1, %arg0, %c0_i32 : i32, i32, i32
  }
  func.func @transform_6(%arg0: i32, %arg1: i32) -> (i32, i32) {
    %c0_i32 = arith.constant 0 : i32
    %c0_i32_0 = arith.constant 0 : i32
    return %arg0, %c0_i32 : i32, i32
  }
}

</mosaic_0001>

<llo_original>
// kernel: tpu_custom_call.1
$region0: #{tpu_custom_call.1}
  #allocation0 [shape = 'u32[]', space=smem, size = 0x4, offset = 0x4, fixed_abs, tag = 'smem constant byte address 0x4 - core index']
  #allocation1 [shape = 'u32[144,128]{1,0:T(1,128)}', space=vmem, size = 0x12000, scoped, tag = 'internal scratch']
  %s0 = inlined_call_operand.vmem [shape: s32[8,1], index: 0, kind: input, shape index: {}]
  %s1 = inlined_call_operand.hbm [shape: f32[8,8,128], index: 1, kind: input, shape index: {}]
  %s2 = inlined_call_operand.hbm [shape: f32[128,128], index: 2, kind: input, shape index: {}]
  %s3 = inlined_call_operand.hbm [shape: f32[128,128], index: 3, kind: input, shape index: {}]
  %s4 = inlined_call_operand.vmem [shape: f32[1,128], index: 4, kind: input, shape index: {}]
  %s5 = inlined_call_operand.hbm [shape: f32[8,8,128], index: 5, kind: output, shape index: {0}]
  %s6 = inlined_call_operand.hbm [shape: f32[8,128], index: 6, kind: output, shape index: {1}]
  %7 = xla_tuple %s5, %s6
  %s8 = sld [smem:[#allocation0]]
  $region54: #{tpu_custom_call.1} parent=0
    _
  %s10 = ssub.s32 1, %s8
  %s11 = scalar_select 0, %s10, %s8
  $region1: #{tpu_custom_call.1} parent=0
    #allocation2 [shape = 'u8[32768]{0}', space=vmem, size = 0x8000, scoped, tag = 'input window, operand 1, single buffered']
    #allocation3 [shape = 's32[1]{0}', space=sflag, size = 0x4, scoped, tag = 'scoped memory for tpu_custom_call.1']
    #allocation4 [shape = 's32[1]{0}', space=sflag, size = 0x4, scoped, tag = 'scoped memory for tpu_custom_call.1']
    #allocation5 [shape = 'u8[65536]{0}', space=vmem, size = 0x10000, scoped, tag = 'input window, operand 2, single buffered']
    #allocation6 [shape = 's32[1]{0}', space=sflag, size = 0x4, scoped, tag = 'scoped memory for tpu_custom_call.1']
    #allocation7 [shape = 'u8[65536]{0}', space=vmem, size = 0x10000, scoped, tag = 'input window, operand 3, single buffered']
    #allocation8 [shape = 'u8[32768]{0}', space=vmem, size = 0x8000, scoped, tag = 'output window, operand 0, single buffered']
    #allocation9 [shape = 'u8[4096]{0}', space=vmem, size = 0x1000, scoped, tag = 'output window, operand 1, single buffered']
    #allocation10 [shape = 's32[1]{0}', space=sflag, size = 0x4, scoped, tag = 'scoped memory for tpu_custom_call.1']
    %12 = vsyncpa [#allocation3], 0
    %13 = vsyncpa [#allocation6], 0
    %14 = vsyncpa [#allocation4], 0
    %15 = vsyncpa [#allocation10], 0
    // Predicated region
    $region2: #{tpu_custom_call.1} parent=1 // pred_check
      _
    $region3: #{tpu_custom_call.1} parent=1 // pred_check_branch
      %17 = sbr.rel (0) target = $region5
    $region4: #{tpu_custom_call.1} parent=1 // pred_region
      _
    $region5: #{tpu_custom_call.1} parent=1 // pred_fallthru
      _
    // Predicated region
    $region6: #{tpu_custom_call.1} parent=1 // pred_check
      _
    $region7: #{tpu_custom_call.1} parent=1 // pred_check_branch
      %19 = sbr.rel (0) target = $region9
    $region8: #{tpu_custom_call.1} parent=1 // pred_region
      %s21 = ssub.s32 1024, 1024
      %22 = vsyncadd [#allocation3], %s21
      %s23 = sshll.u32 [#allocation2], 4
      %s24 = int_to_ptr.vmem [resolvable:$true] %s23
      %29 = dma.hbm_to_vmem [thread:$0]  %s1, 1024, %s24, [#allocation3], 128, 128, 8
    $region9: #{tpu_custom_call.1} parent=1 // pred_fallthru
      _
    // Predicated region
    $region10: #{tpu_custom_call.1} parent=1 // pred_check
      _
    $region11: #{tpu_custom_call.1} parent=1 // pred_check_branch
      %31 = sbr.rel (0) target = $region13
    $region12: #{tpu_custom_call.1} parent=1 // pred_region
      %s33 = ssub.s32 2048, 2048
      %34 = vsyncadd [#allocation6], %s33
      %s35 = sshll.u32 [#allocation5], 4
      %s36 = int_to_ptr.vmem [resolvable:$true] %s35
      %41 = dma.hbm_to_vmem [thread:$0]  %s2, 2048, %s36, [#allocation6], 128, 128, 8
    $region13: #{tpu_custom_call.1} parent=1 // pred_fallthru
      _
    // Predicated region
    $region14: #{tpu_custom_call.1} parent=1 // pred_check
      _
    $region15: #{tpu_custom_call.1} parent=1 // pred_check_branch
      %43 = sbr.rel (0) target = $region17
    $region16: #{tpu_custom_call.1} parent=1 // pred_region
      %s45 = ssub.s32 2048, 2048
      %46 = vsyncadd [#allocation6], %s45
      %s47 = sshll.u32 [#allocation7], 4
      %s48 = int_to_ptr.vmem [resolvable:$true] %s47
      %53 = dma.hbm_to_vmem [thread:$0]  %s3, 2048, %s48, [#allocation6], 128, 128, 8
    $region17: #{tpu_custom_call.1} parent=1 // pred_fallthru
      _
    // Predicated region
    $region18: #{tpu_custom_call.1} parent=1 // pred_check
      _
    $region19: #{tpu_custom_call.1} parent=1 // pred_check_branch
      %55 = sbr.rel (0) target = $region21
    $region20: #{tpu_custom_call.1} parent=1 // pred_region
      _
    $region21: #{tpu_custom_call.1} parent=1 // pred_fallthru
      _
    // Predicated region
    $region22: #{tpu_custom_call.1} parent=1 // pred_check
      _
    $region23: #{tpu_custom_call.1} parent=1 // pred_check_branch
      %57 = sbr.rel (0) target = $region25
    $region24: #{tpu_custom_call.1} parent=1 // pred_region
      %58 = dma.done [#allocation3], 1024
    $region25: #{tpu_custom_call.1} parent=1 // pred_fallthru
      _
    // Predicated region
    $region26: #{tpu_custom_call.1} parent=1 // pred_check
      _
    $region27: #{tpu_custom_call.1} parent=1 // pred_check_branch
      %60 = sbr.rel (0) target = $region29
    $region28: #{tpu_custom_call.1} parent=1 // pred_region
      %61 = dma.done [#allocation6], 2048
    $region29: #{tpu_custom_call.1} parent=1 // pred_fallthru
      _
    // Predicated region
    $region30: #{tpu_custom_call.1} parent=1 // pred_check
      _
    $region31: #{tpu_custom_call.1} parent=1 // pred_check_branch
      %63 = sbr.rel (0) target = $region33
    $region32: #{tpu_custom_call.1} parent=1 // pred_region
      %64 = dma.done [#allocation6], 2048
    $region33: #{tpu_custom_call.1} parent=1 // pred_fallthru
      _
    %p65 = scmp.eq.s32.totalorder 0, 0
    // Predicated region
    $region34: #{tpu_custom_call.1} parent=1 // pred_check
      %p66 = pneg %p65
    $region35: #{tpu_custom_call.1} parent=1 // pred_check_branch
      %68 = sbr.rel (%p66) target = $region37
    $region36: #{tpu_custom_call.1} parent=1 // pred_region
      %69 = vst [vmem:[#allocation9] sm:$0xff] 0.0
    $region37: #{tpu_custom_call.1} parent=1 // pred_fallthru
      _
    %v70 = vld [vmem:[#allocation2] sm:$0xff]
    %v71 = vld [vmem:[#allocation2 + $0x8] sm:$0xff]
    %v72 = vld [vmem:[#allocation2 + $0x10] sm:$0xff]
    %v73 = vld [vmem:[#allocation2 + $0x18] sm:$0xff]
    %v74 = vld [vmem:[#allocation2 + $0x20] sm:$0xff]
    %v75 = vld [vmem:[#allocation2 + $0x28] sm:$0xff]
    %v76 = vld [vmem:[#allocation2 + $0x30] sm:$0xff]
    %v77 = vld [vmem:[#allocation2 + $0x38] sm:$0xff]
    %v78 = vld [vmem:[#allocation5] sm:$0xff]
    %v79 = vld [vmem:[#allocation5 + $0x8] sm:$0xff]
    %v80 = vld [vmem:[#allocation5 + $0x10] sm:$0xff]
    %v81 = vld [vmem:[#allocation5 + $0x18] sm:$0xff]
    %v82 = vld [vmem:[#allocation5 + $0x20] sm:$0xff]
    %v83 = vld [vmem:[#allocation5 + $0x28] sm:$0xff]
    %v84 = vld [vmem:[#allocation5 + $0x30] sm:$0xff]
    %v85 = vld [vmem:[#allocation5 + $0x38] sm:$0xff]
    %v86 = vld [vmem:[#allocation5 + $0x40] sm:$0xff]
    %v87 = vld [vmem:[#allocation5 + $0x48] sm:$0xff]
    %v88 = vld [vmem:[#allocation5 + $0x50] sm:$0xff]
    %v89 = vld [vmem:[#allocation5 + $0x58] sm:$0xff]
    %v90 = vld [vmem:[#allocation5 + $0x60] sm:$0xff]
    %v91 = vld [vmem:[#allocation5 + $0x68] sm:$0xff]
    %v92 = vld [vmem:[#allocation5 + $0x70] sm:$0xff]
    %v93 = vld [vmem:[#allocation5 + $0x78] sm:$0xff]
    %94 = vmatprep.subr.mxu0 0.0
    %95 = vmatpush1.msra.mxu0 %v93
    %96 = vmatprep.subr.mxu0 0.0
    %97 = vmatpush1.msra.mxu0 %v92
    %98 = vmatprep.subr.mxu0 0.0
    %99 = vmatpush1.msra.mxu0 %v91
    %100 = vmatprep.subr.mxu0 0.0
    %101 = vmatpush1.msra.mxu0 %v90
    %102 = vmatprep.subr.mxu0 0.0
    %103 = vmatpush1.msra.mxu0 %v89
    %104 = vmatprep.subr.mxu0 0.0
    %105 = vmatpush1.msra.mxu0 %v88
    %106 = vmatprep.subr.mxu0 0.0
    %107 = vmatpush1.msra.mxu0 %v87
    %108 = vmatprep.subr.mxu0 0.0
    %109 = vmatpush1.msra.mxu0 %v86
    %110 = vmatprep.subr.mxu0 0.0
    %111 = vmatpush1.msra.mxu0 %v85
    %112 = vmatprep.subr.mxu0 0.0
    %113 = vmatpush1.msra.mxu0 %v84
    %114 = vmatprep.subr.mxu0 0.0
    %115 = vmatpush1.msra.mxu0 %v83
    %116 = vmatprep.subr.mxu0 0.0
    %117 = vmatpush1.msra.mxu0 %v82
    %118 = vmatprep.subr.mxu0 0.0
    %119 = vmatpush1.msra.mxu0 %v81
    %120 = vmatprep.subr.mxu0 0.0
    %121 = vmatpush1.msra.mxu0 %v80
    %122 = vmatprep.subr.mxu0 0.0
    %123 = vmatpush1.msra.mxu0 %v79
    %124 = vmatprep.subr.mxu0 0.0
    %125 = vmatpush1.msra.mxu0 %v78
    %126 = vmatprep.subr.mxu0 0.0
    %127 = vmatpush2.msra.mxu0 0.0
    %128 = vmatprep.subr.mxu0 0.0
    %129 = vmatpush2.msra.mxu0 0.0
    %130 = vmatprep.subr.mxu0 0.0
    %131 = vmatpush2.msra.mxu0 0.0
    %132 = vmatprep.subr.mxu0 0.0
    %133 = vmatpush2.msra.mxu0 0.0
    %134 = vmatprep.subr.mxu0 0.0
    %135 = vmatpush2.msra.mxu0 0.0
    %136 = vmatprep.subr.mxu0 0.0
    %137 = vmatpush2.msra.mxu0 0.0
    %138 = vmatprep.subr.mxu0 0.0
    %139 = vmatpush2.msra.mxu0 0.0
    %140 = vmatprep.subr.mxu0 0.0
    %141 = vmatpush2.msra.mxu0 0.0
    %142 = vmatprep.subr.mxu0 0.0
    %143 = vmatpush2.msra.mxu0 0.0
    %144 = vmatprep.subr.mxu0 0.0
    %145 = vmatpush2.msra.mxu0 0.0
    %146 = vmatprep.subr.mxu0 0.0
    %147 = vmatpush2.msra.mxu0 0.0
    %148 = vmatprep.subr.mxu0 0.0
    %149 = vmatpush2.msra.mxu0 0.0
    %150 = vmatprep.subr.mxu0 0.0
    %151 = vmatpush2.msra.mxu0 0.0
    %152 = vmatprep.subr.mxu0 0.0
    %153 = vmatpush2.msra.mxu0 0.0
    %154 = vmatprep.subr.mxu0 0.0
    %155 = vmatpush2.msra.mxu0 0.0
    %156 = vmatprep.subr.mxu0 0.0
    %157 = vmatpush2.msra.mxu0 0.0
    %158 = vmatprep.mubr.f32.mxu0 0.0
    %159 = vmatmul.mubr.f32.gmra.mxu0 %v70
    %v160 = vpop.f32.mrf.mxu0
    %v161 = vadd.f32 0.0, %v160
    %v162 = vpop.f32.mrf.mxu0
    %163 = vmatprep.mubr.f32.mxu0 0.0
    %164 = vmatmul.mubr.f32.gmra.mxu0 %v71
    %v165 = vpop.f32.mrf.mxu0
    %v166 = vadd.f32 0.0, %v165
    %v167 = vpop.f32.mrf.mxu0
    %168 = vmatprep.mubr.f32.mxu0 0.0
    %169 = vmatmul.mubr.f32.gmra.mxu0 %v72
    %v170 = vpop.f32.mrf.mxu0
    %v171 = vadd.f32 0.0, %v170
    %v172 = vpop.f32.mrf.mxu0
    %173 = vmatprep.mubr.f32.mxu0 0.0
    %174 = vmatmul.mubr.f32.gmra.mxu0 %v73
    %v175 = vpop.f32.mrf.mxu0
    %v176 = vadd.f32 0.0, %v175
    %v177 = vpop.f32.mrf.mxu0
    %178 = vmatprep.mubr.f32.mxu0 0.0
    %179 = vmatmul.mubr.f32.gmra.mxu0 %v74
    %v180 = vpop.f32.mrf.mxu0
    %v181 = vadd.f32 0.0, %v180
    %v182 = vpop.f32.mrf.mxu0
    %183 = vmatprep.mubr.f32.mxu0 0.0
    %184 = vmatmul.mubr.f32.gmra.mxu0 %v75
    %v185 = vpop.f32.mrf.mxu0
    %v186 = vadd.f32 0.0, %v185
    %v187 = vpop.f32.mrf.mxu0
    %188 = vmatprep.mubr.f32.mxu0 0.0
    %189 = vmatmul.mubr.f32.gmra.mxu0 %v76
    %v190 = vpop.f32.mrf.mxu0
    %v191 = vadd.f32 0.0, %v190
    %v192 = vpop.f32.mrf.mxu0
    %193 = vmatprep.mubr.f32.mxu0 0.0
    %194 = vmatmul.mubr.f32.gmra.mxu0 %v77
    %v195 = vpop.f32.mrf.mxu0
    %v196 = vadd.f32 0.0, %v195
    %v197 = vpop.f32.mrf.mxu0
    %198 = vdwg.mxu0
    %199 = vst [vmem:[#allocation8] sm:$0xff] %v161
    %200 = vst [vmem:[#allocation8 + $0x8] sm:$0xff] %v166
    %201 = vst [vmem:[#allocation8 + $0x10] sm:$0xff] %v171
    %202 = vst [vmem:[#allocation8 + $0x18] sm:$0xff] %v176
    %203 = vst [vmem:[#allocation8 + $0x20] sm:$0xff] %v181
    %204 = vst [vmem:[#allocation8 + $0x28] sm:$0xff] %v186
    %205 = vst [vmem:[#allocation8 + $0x30] sm:$0xff] %v191
    %206 = vst [vmem:[#allocation8 + $0x38] sm:$0xff] %v196
    %v207 = vld [vmem:[#allocation7] sm:$0xff]
    %v208 = vld [vmem:[#allocation7 + $0x8] sm:$0xff]
    %v209 = vld [vmem:[#allocation7 + $0x10] sm:$0xff]
    %v210 = vld [vmem:[#allocation7 + $0x18] sm:$0xff]
    %v211 = vld [vmem:[#allocation7 + $0x20] sm:$0xff]
    %v212 = vld [vmem:[#allocation7 + $0x28] sm:$0xff]
    %v213 = vld [vmem:[#allocation7 + $0x30] sm:$0xff]
    %v214 = vld [vmem:[#allocation7 + $0x38] sm:$0xff]
    %v215 = vld [vmem:[#allocation7 + $0x40] sm:$0xff]
    %v216 = vld [vmem:[#allocation7 + $0x48] sm:$0xff]
    %v217 = vld [vmem:[#allocation7 + $0x50] sm:$0xff]
    %v218 = vld [vmem:[#allocation7 + $0x58] sm:$0xff]
    %v219 = vld [vmem:[#allocation7 + $0x60] sm:$0xff]
    %v220 = vld [vmem:[#allocation7 + $0x68] sm:$0xff]
    %v221 = vld [vmem:[#allocation7 + $0x70] sm:$0xff]
    %v222 = vld [vmem:[#allocation7 + $0x78] sm:$0xff]
    %v223 = vld [vmem:[%s4] sm:$0x1]
    %v224 = vld [vmem:[%s0] sm:$0xff]
    %s225 = smul.u32 0, 8
    %v226 = vld [vmem:[#allocation9] sm:$0xff]
    %v227 = vld [vmem:[#allocation8] sm:$0xff]
    %v229 = vlaneseq
    %v230 = vshrl.u32 %v229, 7
    %v231 = vsub.s32 0, %v230
    %v232 = vrot.slane %v223, %v231
    %v234 = vadd.f32 %v227, %v232
    %235 = vmatprep.subr.mxu0 0.0
    %236 = vmatpush1.msra.mxu0 %v222
    %237 = vmatprep.subr.mxu0 0.0
    %238 = vmatpush1.msra.mxu0 %v221
    %239 = vmatprep.subr.mxu0 0.0
    %240 = vmatpush1.msra.mxu0 %v220
    %241 = vmatprep.subr.mxu0 0.0
    %242 = vmatpush1.msra.mxu0 %v219
    %243 = vmatprep.subr.mxu0 0.0
    %244 = vmatpush1.msra.mxu0 %v218
    %245 = vmatprep.subr.mxu0 0.0
    %246 = vmatpush1.msra.mxu0 %v217
    %247 = vmatprep.subr.mxu0 0.0
    %248 = vmatpush1.msra.mxu0 %v216
    %249 = vmatprep.subr.mxu0 0.0
    %250 = vmatpush1.msra.mxu0 %v215
    %251 = vmatprep.subr.mxu0 0.0
    %252 = vmatpush1.msra.mxu0 %v214
    %253 = vmatprep.subr.mxu0 0.0
    %254 = vmatpush1.msra.mxu0 %v213
    %255 = vmatprep.subr.mxu0 0.0
    %256 = vmatpush1.msra.mxu0 %v212
    %257 = vmatprep.subr.mxu0 0.0
    %258 = vmatpush1.msra.mxu0 %v211
    %259 = vmatprep.subr.mxu0 0.0
    %260 = vmatpush1.msra.mxu0 %v210
    %261 = vmatprep.subr.mxu0 0.0
    %262 = vmatpush1.msra.mxu0 %v209
    %263 = vmatprep.subr.mxu0 0.0
    %264 = vmatpush1.msra.mxu0 %v208
    %265 = vmatprep.subr.mxu0 0.0
    %266 = vmatpush1.msra.mxu0 %v207
    %267 = vmatprep.subr.mxu0 0.0
    %268 = vmatpush2.msra.mxu0 0.0
    %269 = vmatprep.subr.mxu0 0.0
    %270 = vmatpush2.msra.mxu0 0.0
    %271 = vmatprep.subr.mxu0 0.0
    %272 = vmatpush2.msra.mxu0 0.0
    %273 = vmatprep.subr.mxu0 0.0
    %274 = vmatpush2.msra.mxu0 0.0
    %275 = vmatprep.subr.mxu0 0.0
    %276 = vmatpush2.msra.mxu0 0.0
    %277 = vmatprep.subr.mxu0 0.0
    %278 = vmatpush2.msra.mxu0 0.0
    %279 = vmatprep.subr.mxu0 0.0
    %280 = vmatpush2.msra.mxu0 0.0
    %281 = vmatprep.subr.mxu0 0.0
    %282 = vmatpush2.msra.mxu0 0.0
    %283 = vmatprep.subr.mxu0 0.0
    %284 = vmatpush2.msra.mxu0 0.0
    %285 = vmatprep.subr.mxu0 0.0
    %286 = vmatpush2.msra.mxu0 0.0
    %287 = vmatprep.subr.mxu0 0.0
    %288 = vmatpush2.msra.mxu0 0.0
    %289 = vmatprep.subr.mxu0 0.0
    %290 = vmatpush2.msra.mxu0 0.0
    %291 = vmatprep.subr.mxu0 0.0
    %292 = vmatpush2.msra.mxu0 0.0
    %293 = vmatprep.subr.mxu0 0.0
    %294 = vmatpush2.msra.mxu0 0.0
    %295 = vmatprep.subr.mxu0 0.0
    %296 = vmatpush2.msra.mxu0 0.0
    %297 = vmatprep.subr.mxu0 0.0
    %298 = vmatpush2.msra.mxu0 0.0
    %299 = vmatprep.mubr.f32.mxu0 0.0
    %300 = vmatmul.mubr.f32.gmra.mxu0 %v226
    %v301 = vpop.f32.mrf.mxu0
    %v302 = vadd.f32 0.0, %v301
    %v303 = vpop.f32.mrf.mxu0
    %304 = vdwg.mxu0
    %v305 = vadd.f32 %v234, %v302
    %v306 = vtanh.pop %v305
    %v307 = vstv %s225
    %vm308 = vcmp.lt.s32.totalorder %v307, %v224
    %v309 = vsel %vm308, 1, 0
    %310 = vset.pattern.permute.xlu0 0
    %311 = vperm.xlu0 %310, %v309
    %v312 = vpop.permute.xlu0 %311
    %vm313 = vcmp.eq.s32.totalorder %v312, 1
    %v314 = vsel %vm313, %v306, 0.0
    %315 = vst [vmem:[#allocation8] sm:$0xff] %v314
    %v316 = vsel %vm313, %v306, %v226
    %s317 = scalar_lea.vmem [#allocation8], 8
    %v318 = vld [vmem:[%s317] sm:$0xff]
    %v319 = vadd.f32 %v318, %v232
    %320 = vmatprep.subr.mxu0 0.0
    %321 = vmatpush1.msra.mxu0 %v222
    %322 = vmatprep.subr.mxu0 0.0
    %323 = vmatpush1.msra.mxu0 %v221
    %324 = vmatprep.subr.mxu0 0.0
    %325 = vmatpush1.msra.mxu0 %v220
    %326 = vmatprep.subr.mxu0 0.0
    %327 = vmatpush1.msra.mxu0 %v219
    %328 = vmatprep.subr.mxu0 0.0
    %329 = vmatpush1.msra.mxu0 %v218
    %330 = vmatprep.subr.mxu0 0.0
    %331 = vmatpush1.msra.mxu0 %v217
    %332 = vmatprep.subr.mxu0 0.0
    %333 = vmatpush1.msra.mxu0 %v216
    %334 = vmatprep.subr.mxu0 0.0
    %335 = vmatpush1.msra.mxu0 %v215
    %336 = vmatprep.subr.mxu0 0.0
    %337 = vmatpush1.msra.mxu0 %v214
    %338 = vmatprep.subr.mxu0 0.0
    %339 = vmatpush1.msra.mxu0 %v213
    %340 = vmatprep.subr.mxu0 0.0
    %341 = vmatpush1.msra.mxu0 %v212
    %342 = vmatprep.subr.mxu0 0.0
    %343 = vmatpush1.msra.mxu0 %v211
    %344 = vmatprep.subr.mxu0 0.0
    %345 = vmatpush1.msra.mxu0 %v210
    %346 = vmatprep.subr.mxu0 0.0
    %347 = vmatpush1.msra.mxu0 %v209
    %348 = vmatprep.subr.mxu0 0.0
    %349 = vmatpush1.msra.mxu0 %v208
    %350 = vmatprep.subr.mxu0 0.0
    %351 = vmatpush1.msra.mxu0 %v207
    %352 = vmatprep.subr.mxu0 0.0
    %353 = vmatpush2.msra.mxu0 0.0
    %354 = vmatprep.subr.mxu0 0.0
    %355 = vmatpush2.msra.mxu0 0.0
    %356 = vmatprep.subr.mxu0 0.0
    %357 = vmatpush2.msra.mxu0 0.0
    %358 = vmatprep.subr.mxu0 0.0
    %359 = vmatpush2.msra.mxu0 0.0
    %360 = vmatprep.subr.mxu0 0.0
    %361 = vmatpush2.msra.mxu0 0.0
    %362 = vmatprep.subr.mxu0 0.0
    %363 = vmatpush2.msra.mxu0 0.0
    %364 = vmatprep.subr.mxu0 0.0
    %365 = vmatpush2.msra.mxu0 0.0
    %366 = vmatprep.subr.mxu0 0.0
    %367 = vmatpush2.msra.mxu0 0.0
    %368 = vmatprep.subr.mxu0 0.0
    %369 = vmatpush2.msra.mxu0 0.0
    %370 = vmatprep.subr.mxu0 0.0
    %371 = vmatpush2.msra.mxu0 0.0
    %372 = vmatprep.subr.mxu0 0.0
    %373 = vmatpush2.msra.mxu0 0.0
    %374 = vmatprep.subr.mxu0 0.0
    %375 = vmatpush2.msra.mxu0 0.0
    %376 = vmatprep.subr.mxu0 0.0
    %377 = vmatpush2.msra.mxu0 0.0
    %378 = vmatprep.subr.mxu0 0.0
    %379 = vmatpush2.msra.mxu0 0.0
    %380 = vmatprep.subr.mxu0 0.0
    %381 = vmatpush2.msra.mxu0 0.0
    %382 = vmatprep.subr.mxu0 0.0
    %383 = vmatpush2.msra.mxu0 0.0
    %384 = vmatprep.mubr.f32.mxu0 0.0
    %385 = vmatmul.mubr.f32.gmra.mxu0 %v316
    %v386 = vpop.f32.mrf.mxu0
    %v387 = vadd.f32 0.0, %v386
    %v388 = vpop.f32.mrf.mxu0
    %389 = vdwg.mxu0
    %v390 = vadd.f32 %v319, %v387
    %v391 = vtanh.pop %v390
    %s392 = sadd.s32 %s225, 1
    %v393 = vstv %s392
    %vm394 = vcmp.lt.s32.totalorder %v393, %v224
    %v395 = vsel %vm394, 1, 0
    %396 = vset.pattern.permute.xlu0 0
    %397 = vperm.xlu0 %396, %v395
    %v398 = vpop.permute.xlu0 %397
    %vm399 = vcmp.eq.s32.totalorder %v398, 1
    %v400 = vsel %vm399, %v391, 0.0
    %401 = vst [vmem:[%s317] sm:$0xff] %v400
    %v402 = vsel %vm399, %v391, %v316
    %s403 = scalar_lea.vmem [#allocation8], 16
    %v404 = vld [vmem:[%s403] sm:$0xff]
    %v405 = vadd.f32 %v404, %v232
    %406 = vmatprep.subr.mxu0 0.0
    %407 = vmatpush1.msra.mxu0 %v222
    %408 = vmatprep.subr.mxu0 0.0
    %409 = vmatpush1.msra.mxu0 %v221
    %410 = vmatprep.subr.mxu0 0.0
    %411 = vmatpush1.msra.mxu0 %v220
    %412 = vmatprep.subr.mxu0 0.0
    %413 = vmatpush1.msra.mxu0 %v219
    %414 = vmatprep.subr.mxu0 0.0
    %415 = vmatpush1.msra.mxu0 %v218
    %416 = vmatprep.subr.mxu0 0.0
    %417 = vmatpush1.msra.mxu0 %v217
    %418 = vmatprep.subr.mxu0 0.0
    %419 = vmatpush1.msra.mxu0 %v216
    %420 = vmatprep.subr.mxu0 0.0
    %421 = vmatpush1.msra.mxu0 %v215
    %422 = vmatprep.subr.mxu0 0.0
    %423 = vmatpush1.msra.mxu0 %v214
    %424 = vmatprep.subr.mxu0 0.0
    %425 = vmatpush1.msra.mxu0 %v213
    %426 = vmatprep.subr.mxu0 0.0
    %427 = vmatpush1.msra.mxu0 %v212
    %428 = vmatprep.subr.mxu0 0.0
    %429 = vmatpush1.msra.mxu0 %v211
    %430 = vmatprep.subr.mxu0 0.0
    %431 = vmatpush1.msra.mxu0 %v210
    %432 = vmatprep.subr.mxu0 0.0
    %433 = vmatpush1.msra.mxu0 %v209
    %434 = vmatprep.subr.mxu0 0.0
    %435 = vmatpush1.msra.mxu0 %v208
    %436 = vmatprep.subr.mxu0 0.0
    %437 = vmatpush1.msra.mxu0 %v207
    %438 = vmatprep.subr.mxu0 0.0
    %439 = vmatpush2.msra.mxu0 0.0
    %440 = vmatprep.subr.mxu0 0.0
    %441 = vmatpush2.msra.mxu0 0.0
    %442 = vmatprep.subr.mxu0 0.0
    %443 = vmatpush2.msra.mxu0 0.0
    %444 = vmatprep.subr.mxu0 0.0
    %445 = vmatpush2.msra.mxu0 0.0
    %446 = vmatprep.subr.mxu0 0.0
    %447 = vmatpush2.msra.mxu0 0.0
    %448 = vmatprep.subr.mxu0 0.0
    %449 = vmatpush2.msra.mxu0 0.0
    %450 = vmatprep.subr.mxu0 0.0
    %451 = vmatpush2.msra.mxu0 0.0
    %452 = vmatprep.subr.mxu0 0.0
    %453 = vmatpush2.msra.mxu0 0.0
    %454 = vmatprep.subr.mxu0 0.0
    %455 = vmatpush2.msra.mxu0 0.0
    %456 = vmatprep.subr.mxu0 0.0
    %457 = vmatpush2.msra.mxu0 0.0
    %458 = vmatprep.subr.mxu0 0.0
    %459 = vmatpush2.msra.mxu0 0.0
    %460 = vmatprep.subr.mxu0 0.0
    %461 = vmatpush2.msra.mxu0 0.0
    %462 = vmatprep.subr.mxu0 0.0
    %463 = vmatpush2.msra.mxu0 0.0
    %464 = vmatprep.subr.mxu0 0.0
    %465 = vmatpush2.msra.mxu0 0.0
    %466 = vmatprep.subr.mxu0 0.0
    %467 = vmatpush2.msra.mxu0 0.0
    %468 = vmatprep.subr.mxu0 0.0
    %469 = vmatpush2.msra.mxu0 0.0
    %470 = vmatprep.mubr.f32.mxu0 0.0
    %471 = vmatmul.mubr.f32.gmra.mxu0 %v402
    %v472 = vpop.f32.mrf.mxu0
    %v473 = vadd.f32 0.0, %v472
    %v474 = vpop.f32.mrf.mxu0
    %475 = vdwg.mxu0
    %v476 = vadd.f32 %v405, %v473
    %v477 = vtanh.pop %v476
    %s478 = sadd.s32 %s225, 2
    %v479 = vstv %s478
    %vm480 = vcmp.lt.s32.totalorder %v479, %v224
    %v481 = vsel %vm480, 1, 0
    %482 = vset.pattern.permute.xlu0 0
    %483 = vperm.xlu0 %482, %v481
    %v484 = vpop.permute.xlu0 %483
    %vm485 = vcmp.eq.s32.totalorder %v484, 1
    %v486 = vsel %vm485, %v477, 0.0
    %487 = vst [vmem:[%s403] sm:$0xff] %v486
    %v488 = vsel %vm485, %v477, %v402
    %s489 = scalar_lea.vmem [#allocation8], 24
    %v490 = vld [vmem:[%s489] sm:$0xff]
    %v491 = vadd.f32 %v490, %v232
    %492 = vmatprep.subr.mxu0 0.0
    %493 = vmatpush1.msra.mxu0 %v222
    %494 = vmatprep.subr.mxu0 0.0
    %495 = vmatpush1.msra.mxu0 %v221
    %496 = vmatprep.subr.mxu0 0.0
    %497 = vmatpush1.msra.mxu0 %v220
    %498 = vmatprep.subr.mxu0 0.0
    %499 = vmatpush1.msra.mxu0 %v219
    %500 = vmatprep.subr.mxu0 0.0
    %501 = vmatpush1.msra.mxu0 %v218
    %502 = vmatprep.subr.mxu0 0.0
    %503 = vmatpush1.msra.mxu0 %v217
    %504 = vmatprep.subr.mxu0 0.0
    %505 = vmatpush1.msra.mxu0 %v216
    %506 = vmatprep.subr.mxu0 0.0
    %507 = vmatpush1.msra.mxu0 %v215
    %508 = vmatprep.subr.mxu0 0.0
    %509 = vmatpush1.msra.mxu0 %v214
    %510 = vmatprep.subr.mxu0 0.0
    %511 = vmatpush1.msra.mxu0 %v213
    %512 = vmatprep.subr.mxu0 0.0
    %513 = vmatpush1.msra.mxu0 %v212
    %514 = vmatprep.subr.mxu0 0.0
    %515 = vmatpush1.msra.mxu0 %v211
    %516 = vmatprep.subr.mxu0 0.0
    %517 = vmatpush1.msra.mxu0 %v210
    %518 = vmatprep.subr.mxu0 0.0
    %519 = vmatpush1.msra.mxu0 %v209
    %520 = vmatprep.subr.mxu0 0.0
    %521 = vmatpush1.msra.mxu0 %v208
    %522 = vmatprep.subr.mxu0 0.0
    %523 = vmatpush1.msra.mxu0 %v207
    %524 = vmatprep.subr.mxu0 0.0
    %525 = vmatpush2.msra.mxu0 0.0
    %526 = vmatprep.subr.mxu0 0.0
    %527 = vmatpush2.msra.mxu0 0.0
    %528 = vmatprep.subr.mxu0 0.0
    %529 = vmatpush2.msra.mxu0 0.0
    %530 = vmatprep.subr.mxu0 0.0
    %531 = vmatpush2.msra.mxu0 0.0
    %532 = vmatprep.subr.mxu0 0.0
    %533 = vmatpush2.msra.mxu0 0.0
    %534 = vmatprep.subr.mxu0 0.0
    %535 = vmatpush2.msra.mxu0 0.0
    %536 = vmatprep.subr.mxu0 0.0
    %537 = vmatpush2.msra.mxu0 0.0
    %538 = vmatprep.subr.mxu0 0.0
    %539 = vmatpush2.msra.mxu0 0.0
    %540 = vmatprep.subr.mxu0 0.0
    %541 = vmatpush2.msra.mxu0 0.0
    %542 = vmatprep.subr.mxu0 0.0
    %543 = vmatpush2.msra.mxu0 0.0
    %544 = vmatprep.subr.mxu0 0.0
    %545 = vmatpush2.msra.mxu0 0.0
    %546 = vmatprep.subr.mxu0 0.0
    %547 = vmatpush2.msra.mxu0 0.0
    %548 = vmatprep.subr.mxu0 0.0
    %549 = vmatpush2.msra.mxu0 0.0
    %550 = vmatprep.subr.mxu0 0.0
    %551 = vmatpush2.msra.mxu0 0.0
    %552 = vmatprep.subr.mxu0 0.0
    %553 = vmatpush2.msra.mxu0 0.0
    %554 = vmatprep.subr.mxu0 0.0
    %555 = vmatpush2.msra.mxu0 0.0
    %556 = vmatprep.mubr.f32.mxu0 0.0
    %557 = vmatmul.mubr.f32.gmra.mxu0 %v488
    %v558 = vpop.f32.mrf.mxu0
    %v559 = vadd.f32 0.0, %v558
    %v560 = vpop.f32.mrf.mxu0
    %561 = vdwg.mxu0
    %v562 = vadd.f32 %v491, %v559
    %v563 = vtanh.pop %v562
    %s564 = sadd.s32 %s225, 3
    %v565 = vstv %s564
    %vm566 = vcmp.lt.s32.totalorder %v565, %v224
    %v567 = vsel %vm566, 1, 0
    %568 = vset.pattern.permute.xlu0 0
    %569 = vperm.xlu0 %568, %v567
    %v570 = vpop.permute.xlu0 %569
    %vm571 = vcmp.eq.s32.totalorder %v570, 1
    %v572 = vsel %vm571, %v563, 0.0
    %573 = vst [vmem:[%s489] sm:$0xff] %v572
    %v574 = vsel %vm571, %v563, %v488
    %s575 = scalar_lea.vmem [#allocation8], 32
    %v576 = vld [vmem:[%s575] sm:$0xff]
    %v577 = vadd.f32 %v576, %v232
    %578 = vmatprep.subr.mxu0 0.0
    %579 = vmatpush1.msra.mxu0 %v222
    %580 = vmatprep.subr.mxu0 0.0
    %581 = vmatpush1.msra.mxu0 %v221
    %582 = vmatprep.subr.mxu0 0.0
    %583 = vmatpush1.msra.mxu0 %v220
    %584 = vmatprep.subr.mxu0 0.0
    %585 = vmatpush1.msra.mxu0 %v219
    %586 = vmatprep.subr.mxu0 0.0
    %587 = vmatpush1.msra.mxu0 %v218
    %588 = vmatprep.subr.mxu0 0.0
    %589 = vmatpush1.msra.mxu0 %v217
    %590 = vmatprep.subr.mxu0 0.0
    %591 = vmatpush1.msra.mxu0 %v216
    %592 = vmatprep.subr.mxu0 0.0
    %593 = vmatpush1.msra.mxu0 %v215
    %594 = vmatprep.subr.mxu0 0.0
    %595 = vmatpush1.msra.mxu0 %v214
    %596 = vmatprep.subr.mxu0 0.0
    %597 = vmatpush1.msra.mxu0 %v213
    %598 = vmatprep.subr.mxu0 0.0
    %599 = vmatpush1.msra.mxu0 %v212
    %600 = vmatprep.subr.mxu0 0.0
    %601 = vmatpush1.msra.mxu0 %v211
    %602 = vmatprep.subr.mxu0 0.0
    %603 = vmatpush1.msra.mxu0 %v210
    %604 = vmatprep.subr.mxu0 0.0
    %605 = vmatpush1.msra.mxu0 %v209
    %606 = vmatprep.subr.mxu0 0.0
    %607 = vmatpush1.msra.mxu0 %v208
    %608 = vmatprep.subr.mxu0 0.0
    %609 = vmatpush1.msra.mxu0 %v207
    %610 = vmatprep.subr.mxu0 0.0
    %611 = vmatpush2.msra.mxu0 0.0
    %612 = vmatprep.subr.mxu0 0.0
    %613 = vmatpush2.msra.mxu0 0.0
    %614 = vmatprep.subr.mxu0 0.0
    %615 = vmatpush2.msra.mxu0 0.0
    %616 = vmatprep.subr.mxu0 0.0
    %617 = vmatpush2.msra.mxu0 0.0
    %618 = vmatprep.subr.mxu0 0.0
    %619 = vmatpush2.msra.mxu0 0.0
    %620 = vmatprep.subr.mxu0 0.0
    %621 = vmatpush2.msra.mxu0 0.0
    %622 = vmatprep.subr.mxu0 0.0
    %623 = vmatpush2.msra.mxu0 0.0
    %624 = vmatprep.subr.mxu0 0.0
    %625 = vmatpush2.msra.mxu0 0.0
    %626 = vmatprep.subr.mxu0 0.0
    %627 = vmatpush2.msra.mxu0 0.0
    %628 = vmatprep.subr.mxu0 0.0
    %629 = vmatpush2.msra.mxu0 0.0
    %630 = vmatprep.subr.mxu0 0.0
    %631 = vmatpush2.msra.mxu0 0.0
    %632 = vmatprep.subr.mxu0 0.0
    %633 = vmatpush2.msra.mxu0 0.0
    %634 = vmatprep.subr.mxu0 0.0
    %635 = vmatpush2.msra.mxu0 0.0
    %636 = vmatprep.subr.mxu0 0.0
    %637 = vmatpush2.msra.mxu0 0.0
    %638 = vmatprep.subr.mxu0 0.0
    %639 = vmatpush2.msra.mxu0 0.0
    %640 = vmatprep.subr.mxu0 0.0
    %641 = vmatpush2.msra.mxu0 0.0
    %642 = vmatprep.mubr.f32.mxu0 0.0
    %643 = vmatmul.mubr.f32.gmra.mxu0 %v574
    %v644 = vpop.f32.mrf.mxu0
    %v645 = vadd.f32 0.0, %v644
    %v646 = vpop.f32.mrf.mxu0
    %647 = vdwg.mxu0
    %v648 = vadd.f32 %v577, %v645
    %v649 = vtanh.pop %v648
    %s650 = sadd.s32 %s225, 4
    %v651 = vstv %s650
    %vm652 = vcmp.lt.s32.totalorder %v651, %v224
    %v653 = vsel %vm652, 1, 0
    %654 = vset.pattern.permute.xlu0 0
    %655 = vperm.xlu0 %654, %v653
    %v656 = vpop.permute.xlu0 %655
    %vm657 = vcmp.eq.s32.totalorder %v656, 1
    %v658 = vsel %vm657, %v649, 0.0
    %659 = vst [vmem:[%s575] sm:$0xff] %v658
    %v660 = vsel %vm657, %v649, %v574
    %s661 = scalar_lea.vmem [#allocation8], 40
    %v662 = vld [vmem:[%s661] sm:$0xff]
    %v663 = vadd.f32 %v662, %v232
    %664 = vmatprep.subr.mxu0 0.0
    %665 = vmatpush1.msra.mxu0 %v222
    %666 = vmatprep.subr.mxu0 0.0
    %667 = vmatpush1.msra.mxu0 %v221
    %668 = vmatprep.subr.mxu0 0.0
    %669 = vmatpush1.msra.mxu0 %v220
    %670 = vmatprep.subr.mxu0 0.0
    %671 = vmatpush1.msra.mxu0 %v219
    %672 = vmatprep.subr.mxu0 0.0
    %673 = vmatpush1.msra.mxu0 %v218
    %674 = vmatprep.subr.mxu0 0.0
    %675 = vmatpush1.msra.mxu0 %v217
    %676 = vmatprep.subr.mxu0 0.0
    %677 = vmatpush1.msra.mxu0 %v216
    %678 = vmatprep.subr.mxu0 0.0
    %679 = vmatpush1.msra.mxu0 %v215
    %680 = vmatprep.subr.mxu0 0.0
    %681 = vmatpush1.msra.mxu0 %v214
    %682 = vmatprep.subr.mxu0 0.0
    %683 = vmatpush1.msra.mxu0 %v213
    %684 = vmatprep.subr.mxu0 0.0
    %685 = vmatpush1.msra.mxu0 %v212
    %686 = vmatprep.subr.mxu0 0.0
    %687 = vmatpush1.msra.mxu0 %v211
    %688 = vmatprep.subr.mxu0 0.0
    %689 = vmatpush1.msra.mxu0 %v210
    %690 = vmatprep.subr.mxu0 0.0
    %691 = vmatpush1.msra.mxu0 %v209
    %692 = vmatprep.subr.mxu0 0.0
    %693 = vmatpush1.msra.mxu0 %v208
    %694 = vmatprep.subr.mxu0 0.0
    %695 = vmatpush1.msra.mxu0 %v207
    %696 = vmatprep.subr.mxu0 0.0
    %697 = vmatpush2.msra.mxu0 0.0
    %698 = vmatprep.subr.mxu0 0.0
    %699 = vmatpush2.msra.mxu0 0.0
    %700 = vmatprep.subr.mxu0 0.0
    %701 = vmatpush2.msra.mxu0 0.0
    %702 = vmatprep.subr.mxu0 0.0
    %703 = vmatpush2.msra.mxu0 0.0
    %704 = vmatprep.subr.mxu0 0.0
    %705 = vmatpush2.msra.mxu0 0.0
    %706 = vmatprep.subr.mxu0 0.0
    %707 = vmatpush2.msra.mxu0 0.0
    %708 = vmatprep.subr.mxu0 0.0
    %709 = vmatpush2.msra.mxu0 0.0
    %710 = vmatprep.subr.mxu0 0.0
    %711 = vmatpush2.msra.mxu0 0.0
    %712 = vmatprep.subr.mxu0 0.0
    %713 = vmatpush2.msra.mxu0 0.0
    %714 = vmatprep.subr.mxu0 0.0
    %715 = vmatpush2.msra.mxu0 0.0
    %716 = vmatprep.subr.mxu0 0.0
    %717 = vmatpush2.msra.mxu0 0.0
    %718 = vmatprep.subr.mxu0 0.0
    %719 = vmatpush2.msra.mxu0 0.0
    %720 = vmatprep.subr.mxu0 0.0
    %721 = vmatpush2.msra.mxu0 0.0
    %722 = vmatprep.subr.mxu0 0.0
    %723 = vmatpush2.msra.mxu0 0.0
    %724 = vmatprep.subr.mxu0 0.0
    %725 = vmatpush2.msra.mxu0 0.0
    %726 = vmatprep.subr.mxu0 0.0
    %727 = vmatpush2.msra.mxu0 0.0
    %728 = vmatprep.mubr.f32.mxu0 0.0
    %729 = vmatmul.mubr.f32.gmra.mxu0 %v660
    %v730 = vpop.f32.mrf.mxu0
    %v731 = vadd.f32 0.0, %v730
    %v732 = vpop.f32.mrf.mxu0
    %733 = vdwg.mxu0
    %v734 = vadd.f32 %v663, %v731
    %v735 = vtanh.pop %v734
    %s736 = sadd.s32 %s225, 5
    %v737 = vstv %s736
    %vm738 = vcmp.lt.s32.totalorder %v737, %v224
    %v739 = vsel %vm738, 1, 0
    %740 = vset.pattern.permute.xlu0 0
    %741 = vperm.xlu0 %740, %v739
    %v742 = vpop.permute.xlu0 %741
    %vm743 = vcmp.eq.s32.totalorder %v742, 1
    %v744 = vsel %vm743, %v735, 0.0
    %745 = vst [vmem:[%s661] sm:$0xff] %v744
    %v746 = vsel %vm743, %v735, %v660
    %s747 = scalar_lea.vmem [#allocation8], 48
    %v748 = vld [vmem:[%s747] sm:$0xff]
    %v749 = vadd.f32 %v748, %v232
    %750 = vmatprep.subr.mxu0 0.0
    %751 = vmatpush1.msra.mxu0 %v222
    %752 = vmatprep.subr.mxu0 0.0
    %753 = vmatpush1.msra.mxu0 %v221
    %754 = vmatprep.subr.mxu0 0.0
    %755 = vmatpush1.msra.mxu0 %v220
    %756 = vmatprep.subr.mxu0 0.0
    %757 = vmatpush1.msra.mxu0 %v219
    %758 = vmatprep.subr.mxu0 0.0
    %759 = vmatpush1.msra.mxu0 %v218
    %760 = vmatprep.subr.mxu0 0.0
    %761 = vmatpush1.msra.mxu0 %v217
    %762 = vmatprep.subr.mxu0 0.0
    %763 = vmatpush1.msra.mxu0 %v216
    %764 = vmatprep.subr.mxu0 0.0
    %765 = vmatpush1.msra.mxu0 %v215
    %766 = vmatprep.subr.mxu0 0.0
    %767 = vmatpush1.msra.mxu0 %v214
    %768 = vmatprep.subr.mxu0 0.0
    %769 = vmatpush1.msra.mxu0 %v213
    %770 = vmatprep.subr.mxu0 0.0
    %771 = vmatpush1.msra.mxu0 %v212
    %772 = vmatprep.subr.mxu0 0.0
    %773 = vmatpush1.msra.mxu0 %v211
    %774 = vmatprep.subr.mxu0 0.0
    %775 = vmatpush1.msra.mxu0 %v210
    %776 = vmatprep.subr.mxu0 0.0
    %777 = vmatpush1.msra.mxu0 %v209
    %778 = vmatprep.subr.mxu0 0.0
    %779 = vmatpush1.msra.mxu0 %v208
    %780 = vmatprep.subr.mxu0 0.0
    %781 = vmatpush1.msra.mxu0 %v207
    %782 = vmatprep.subr.mxu0 0.0
    %783 = vmatpush2.msra.mxu0 0.0
    %784 = vmatprep.subr.mxu0 0.0
    %785 = vmatpush2.msra.mxu0 0.0
    %786 = vmatprep.subr.mxu0 0.0
    %787 = vmatpush2.msra.mxu0 0.0
    %788 = vmatprep.subr.mxu0 0.0
    %789 = vmatpush2.msra.mxu0 0.0
    %790 = vmatprep.subr.mxu0 0.0
    %791 = vmatpush2.msra.mxu0 0.0
    %792 = vmatprep.subr.mxu0 0.0
    %793 = vmatpush2.msra.mxu0 0.0
    %794 = vmatprep.subr.mxu0 0.0
    %795 = vmatpush2.msra.mxu0 0.0
    %796 = vmatprep.subr.mxu0 0.0
    %797 = vmatpush2.msra.mxu0 0.0
    %798 = vmatprep.subr.mxu0 0.0
    %799 = vmatpush2.msra.mxu0 0.0
    %800 = vmatprep.subr.mxu0 0.0
    %801 = vmatpush2.msra.mxu0 0.0
    %802 = vmatprep.subr.mxu0 0.0
    %803 = vmatpush2.msra.mxu0 0.0
    %804 = vmatprep.subr.mxu0 0.0
    %805 = vmatpush2.msra.mxu0 0.0
    %806 = vmatprep.subr.mxu0 0.0
    %807 = vmatpush2.msra.mxu0 0.0
    %808 = vmatprep.subr.mxu0 0.0
    %809 = vmatpush2.msra.mxu0 0.0
    %810 = vmatprep.subr.mxu0 0.0
    %811 = vmatpush2.msra.mxu0 0.0
    %812 = vmatprep.subr.mxu0 0.0
    %813 = vmatpush2.msra.mxu0 0.0
    %814 = vmatprep.mubr.f32.mxu0 0.0
    %815 = vmatmul.mubr.f32.gmra.mxu0 %v746
    %v816 = vpop.f32.mrf.mxu0
    %v817 = vadd.f32 0.0, %v816
    %v818 = vpop.f32.mrf.mxu0
    %819 = vdwg.mxu0
    %v820 = vadd.f32 %v749, %v817
    %v821 = vtanh.pop %v820
    %s822 = sadd.s32 %s225, 6
    %v823 = vstv %s822
    %vm824 = vcmp.lt.s32.totalorder %v823, %v224
    %v825 = vsel %vm824, 1, 0
    %826 = vset.pattern.permute.xlu0 0
    %827 = vperm.xlu0 %826, %v825
    %v828 = vpop.permute.xlu0 %827
    %vm829 = vcmp.eq.s32.totalorder %v828, 1
    %v830 = vsel %vm829, %v821, 0.0
    %831 = vst [vmem:[%s747] sm:$0xff] %v830
    %v832 = vsel %vm829, %v821, %v746
    %s833 = scalar_lea.vmem [#allocation8], 56
    %v834 = vld [vmem:[%s833] sm:$0xff]
    %v835 = vadd.f32 %v834, %v232
    %836 = vmatprep.subr.mxu0 0.0
    %837 = vmatpush1.msra.mxu0 %v222
    %838 = vmatprep.subr.mxu0 0.0
    %839 = vmatpush1.msra.mxu0 %v221
    %840 = vmatprep.subr.mxu0 0.0
    %841 = vmatpush1.msra.mxu0 %v220
    %842 = vmatprep.subr.mxu0 0.0
    %843 = vmatpush1.msra.mxu0 %v219
    %844 = vmatprep.subr.mxu0 0.0
    %845 = vmatpush1.msra.mxu0 %v218
    %846 = vmatprep.subr.mxu0 0.0
    %847 = vmatpush1.msra.mxu0 %v217
    %848 = vmatprep.subr.mxu0 0.0
    %849 = vmatpush1.msra.mxu0 %v216
    %850 = vmatprep.subr.mxu0 0.0
    %851 = vmatpush1.msra.mxu0 %v215
    %852 = vmatprep.subr.mxu0 0.0
    %853 = vmatpush1.msra.mxu0 %v214
    %854 = vmatprep.subr.mxu0 0.0
    %855 = vmatpush1.msra.mxu0 %v213
    %856 = vmatprep.subr.mxu0 0.0
    %857 = vmatpush1.msra.mxu0 %v212
    %858 = vmatprep.subr.mxu0 0.0
    %859 = vmatpush1.msra.mxu0 %v211
    %860 = vmatprep.subr.mxu0 0.0
    %861 = vmatpush1.msra.mxu0 %v210
    %862 = vmatprep.subr.mxu0 0.0
    %863 = vmatpush1.msra.mxu0 %v209
    %864 = vmatprep.subr.mxu0 0.0
    %865 = vmatpush1.msra.mxu0 %v208
    %866 = vmatprep.subr.mxu0 0.0
    %867 = vmatpush1.msra.mxu0 %v207
    %868 = vmatprep.subr.mxu0 0.0
    %869 = vmatpush2.msra.mxu0 0.0
    %870 = vmatprep.subr.mxu0 0.0
    %871 = vmatpush2.msra.mxu0 0.0
    %872 = vmatprep.subr.mxu0 0.0
    %873 = vmatpush2.msra.mxu0 0.0
    %874 = vmatprep.subr.mxu0 0.0
    %875 = vmatpush2.msra.mxu0 0.0
    %876 = vmatprep.subr.mxu0 0.0
    %877 = vmatpush2.msra.mxu0 0.0
    %878 = vmatprep.subr.mxu0 0.0
    %879 = vmatpush2.msra.mxu0 0.0
    %880 = vmatprep.subr.mxu0 0.0
    %881 = vmatpush2.msra.mxu0 0.0
    %882 = vmatprep.subr.mxu0 0.0
    %883 = vmatpush2.msra.mxu0 0.0
    %884 = vmatprep.subr.mxu0 0.0
    %885 = vmatpush2.msra.mxu0 0.0
    %886 = vmatprep.subr.mxu0 0.0
    %887 = vmatpush2.msra.mxu0 0.0
    %888 = vmatprep.subr.mxu0 0.0
    %889 = vmatpush2.msra.mxu0 0.0
    %890 = vmatprep.subr.mxu0 0.0
    %891 = vmatpush2.msra.mxu0 0.0
    %892 = vmatprep.subr.mxu0 0.0
    %893 = vmatpush2.msra.mxu0 0.0
    %894 = vmatprep.subr.mxu0 0.0
    %895 = vmatpush2.msra.mxu0 0.0
    %896 = vmatprep.subr.mxu0 0.0
    %897 = vmatpush2.msra.mxu0 0.0
    %898 = vmatprep.subr.mxu0 0.0
    %899 = vmatpush2.msra.mxu0 0.0
    %900 = vmatprep.mubr.f32.mxu0 0.0
    %901 = vmatmul.mubr.f32.gmra.mxu0 %v832
    %v902 = vpop.f32.mrf.mxu0
    %v903 = vadd.f32 0.0, %v902
    %v904 = vpop.f32.mrf.mxu0
    %905 = vdwg.mxu0
    %v906 = vadd.f32 %v835, %v903
    %v907 = vtanh.pop %v906
    %s908 = sadd.s32 %s225, 7
    %v909 = vstv %s908
    %vm910 = vcmp.lt.s32.totalorder %v909, %v224
    %v911 = vsel %vm910, 1, 0
    %912 = vset.pattern.permute.xlu0 0
    %913 = vperm.xlu0 %912, %v911
    %v914 = vpop.permute.xlu0 %913
    %vm915 = vcmp.eq.s32.totalorder %v914, 1
    %v916 = vsel %vm915, %v907, 0.0
    %917 = vst [vmem:[%s833] sm:$0xff] %v916
    %v918 = vsel %vm915, %v907, %v832
    %919 = vst [vmem:[#allocation9] sm:$0xff] %v918
    // Predicated region
    $region38: #{tpu_custom_call.1} parent=1 // pred_check
      _
    $region39: #{tpu_custom_call.1} parent=1 // pred_check_branch
      %921 = sbr.rel (0) target = $region41
    $region40: #{tpu_custom_call.1} parent=1 // pred_region
      %s923 = ssub.s32 1024, 1024
      %924 = vsyncadd [#allocation4], %s923
      %s925 = sshll.u32 [#allocation8], 4
      %s926 = int_to_ptr.vmem [resolvable:$true] %s925
      %931 = dma.vmem_to_hbm [thread:$0]  %s926, 1024, %s5, [#allocation4], 128, 128, 8
    $region41: #{tpu_custom_call.1} parent=1 // pred_fallthru
      _
    // Predicated region
    $region42: #{tpu_custom_call.1} parent=1 // pred_check
      _
    $region43: #{tpu_custom_call.1} parent=1 // pred_check_branch
      %933 = sbr.rel (0) target = $region45
    $region44: #{tpu_custom_call.1} parent=1 // pred_region
      %s935 = ssub.s32 128, 128
      %936 = vsyncadd [#allocation10], %s935
      %s938 = sshll.u32 [#allocation9], 4
      %s939 = int_to_ptr.vmem [resolvable:$true] %s938
      %941 = dma.vmem_to_hbm [thread:$0]  %s939, 128, %s6, [#allocation10]
    $region45: #{tpu_custom_call.1} parent=1 // pred_fallthru
      _
    // Predicated region
    $region46: #{tpu_custom_call.1} parent=1 // pred_check
      _
    $region47: #{tpu_custom_call.1} parent=1 // pred_check_branch
      %943 = sbr.rel (0) target = $region49
    $region48: #{tpu_custom_call.1} parent=1 // pred_region
      %944 = dma.done [#allocation4], 1024
    $region49: #{tpu_custom_call.1} parent=1 // pred_fallthru
      _
    // Predicated region
    $region50: #{tpu_custom_call.1} parent=1 // pred_check
      _
    $region51: #{tpu_custom_call.1} parent=1 // pred_check_branch
      %946 = sbr.rel (0) target = $region53
    $region52: #{tpu_custom_call.1} parent=1 // pred_region
      %947 = dma.done [#allocation10], 128
    $region53: #{tpu_custom_call.1} parent=1 // pred_fallthru
      _
    %948 = vsyncpa [#allocation3], 1
    %949 = vsyncpa [#allocation6], 1
    %950 = vsyncpa [#allocation4], 1
    %951 = vsyncpa [#allocation10], 1

</llo_original>
